<compile_context>
chip_gen: v7x
topology: tpu7x:2x2x1
jax: 0.10.0
libtpu: 0.0.40
codegen_flags: <defaults>
</compile_context>

<pallas_src>
import jax
import jax.numpy as jnp
from jax.experimental import pallas as pl
from jax.experimental.pallas import tpu as pltpu

_MIB = 1024 * 1024


def _tpu_policy():
    """Generation-aware budgets: (double-buffer VMEM budget, scoped cap, #TCs)."""
    try:
        kind = jax.devices()[0].device_kind.lower()
    except Exception:
        kind = ""
    if "7" in kind:  # v7x: 64 MiB VMEM per TensorCore, 2 TensorCores per chip
        return {"vmem_budget": 44 * _MIB, "vmem_cap": 52 * _MIB, "num_cores": 2}
    # v5e / v6e: 128 MiB VMEM, single TensorCore -> one maximal block.
    return {"vmem_budget": 96 * _MIB, "vmem_cap": 110 * _MIB, "num_cores": 1}


def _make_flat_kernel(C1, C2, k, HW):
    """Lane-dense kernel on (NB, C*HW) views; all offsets are multiples of HW."""

    def kernel(x1_ref, x2_ref, o_ref):
        a = x1_ref[...]          # read each input from VMEM exactly once
        b = x2_ref[...]
        o_ref[:, 0:C1 * HW] = a
        o_ref[:, C1 * HW:(C1 + C2) * HW] = b
        base = (C1 + C2) * HW
        if k <= C1:
            o_ref[:, base:base + k * HW] = a[:, 0:k * HW]
        else:
            o_ref[:, base:base + C1 * HW] = a
            o_ref[:, base + C1 * HW:base + k * HW] = b[:, 0:(k - C1) * HW]

    return kernel


def _make_chan_kernel(C1, C2, k):
    """Channel-major kernel on (NB, C, hw) views (fallback layouts)."""

    def kernel(x1_ref, x2_ref, o_ref):
        a = x1_ref[...]
        b = x2_ref[...]
        o_ref[:, 0:C1, :] = a
        o_ref[:, C1:C1 + C2, :] = b
        base = C1 + C2
        if k <= C1:
            o_ref[:, base:base + k, :] = a[:, 0:k, :]
        else:
            o_ref[:, base:base + C1, :] = a
            o_ref[:, base + C1:base + k, :] = b[:, 0:k - C1, :]

    return kernel


def model_forward(x1, x2):
    """Pallas implementation of Model.forward for NCHW inputs."""
    B, C1, H, W = x1.shape
    B2, C2, H2, W2 = x2.shape
    assert B == B2 and H == H2 and W == W2, "x1/x2 must match on non-channel dims"

    # Match torch.cat / jnp.concatenate dtype promotion.
    out_dtype = jnp.result_type(x1.dtype, x2.dtype)
    x1 = x1.astype(out_dtype)
    x2 = x2.astype(out_dtype)

    HW = H * W
    k = min(H, C1 + C2)          # PyTorch clamps v1[:, :x1.size(2)]
    Cout = C1 + C2 + k

    pol = _tpu_policy()
    itemsize = jnp.dtype(out_dtype).itemsize
    row_elems = C1 + C2 + Cout                        # elems per batch per HW point
    per_batch = 2 * row_elems * HW * itemsize         # double-buffered, per batch
    total_bytes = row_elems * HW * B * itemsize       # everything touching HBM
    tiny = total_bytes <= 2 * _MIB

    cost = pl.CostEstimate(flops=0, transcendentals=0,
                           bytes_accessed=int(total_bytes))

    def vmem_limit(fp_bytes):
        return int(min(fp_bytes * 1.25 + 2 * _MIB, pol["vmem_cap"]))

    divisors = [d for d in range(1, B + 1) if B % d == 0]
    feasible = [d for d in divisors if d * per_batch <= pol["vmem_budget"]]

    if feasible:
        if tiny or pol["num_cores"] == 1:
            NB = max(feasible)   # single TC (or tiny input): one maximal block
        else:
            pref = [d for d in feasible if B // d >= pol["num_cores"]]
            NB = max(pref) if pref else max(feasible)
        grid_b = B // NB

        # Fully lane-dense layout needs aligned concat offsets (HW % 128 == 0)
        # and a block that satisfies the (8,128) rule on its sublane dim.
        use_flat = (HW % 128 == 0) and (grid_b == 1 or NB % 8 == 0)
        vlim = vmem_limit(NB * per_batch)

        if use_flat:
            out = pl.pallas_call(
                _make_flat_kernel(C1, C2, k, HW),
                out_shape=jax.ShapeDtypeStruct((B, Cout * HW), out_dtype),
                grid_spec=pltpu.PrefetchScalarGridSpec(
                    num_scalar_prefetch=0,
                    grid=(grid_b,),
                    in_specs=[
                        pl.BlockSpec((NB, C1 * HW), lambda b: (b, 0)),
                        pl.BlockSpec((NB, C2 * HW), lambda b: (b, 0)),
                    ],
                    out_specs=pl.BlockSpec((NB, Cout * HW), lambda b: (b, 0)),
                ),
                compiler_params=pltpu.CompilerParams(
                    dimension_semantics=("parallel",),
                    vmem_limit_bytes=vlim,
                ),
                cost_estimate=cost,
            )(x1.reshape(B, C1 * HW), x2.reshape(B, C2 * HW))
            return out.reshape(B, Cout, H, W)

        out = pl.pallas_call(
            _make_chan_kernel(C1, C2, k),
            out_shape=jax.ShapeDtypeStruct((B, Cout, HW), out_dtype),
            grid_spec=pltpu.PrefetchScalarGridSpec(
                num_scalar_prefetch=0,
                grid=(grid_b,),
                in_specs=[
                    pl.BlockSpec((NB, C1, HW), lambda b: (b, 0, 0)),
                    pl.BlockSpec((NB, C2, HW), lambda b: (b, 0, 0)),
                ],
                out_specs=pl.BlockSpec((NB, Cout, HW), lambda b: (b, 0, 0)),
            ),
            compiler_params=pltpu.CompilerParams(
                dimension_semantics=("parallel",),
                vmem_limit_bytes=vlim,
            ),
            cost_estimate=cost,
        )(x1.reshape(B, C1, HW), x2.reshape(B, C2, HW))
        return out.reshape(B, Cout, H, W)

    # ---- fallback: even one batch exceeds the VMEM budget -> tile the HW axis.
    hw_cands = [d for d in range(128, HW + 1, 128)
                if HW % d == 0 and 2 * row_elems * d * itemsize <= pol["vmem_budget"]]
    hw_tile = max(hw_cands) if hw_cands else HW
    grid_hw = HW // hw_tile
    out = pl.pallas_call(
        _make_chan_kernel(C1, C2, k),
        out_shape=jax.ShapeDtypeStruct((B, Cout, HW), out_dtype),
        grid_spec=pltpu.PrefetchScalarGridSpec(
            num_scalar_prefetch=0,
            grid=(B, grid_hw),
            in_specs=[
                pl.BlockSpec((1, C1, hw_tile), lambda b, h: (b, 0, h)),
                pl.BlockSpec((1, C2, hw_tile), lambda b, h: (b, 0, h)),
            ],
            out_specs=pl.BlockSpec((1, Cout, hw_tile), lambda b, h: (b, 0, h)),
        ),
        compiler_params=pltpu.CompilerParams(
            dimension_semantics=("parallel", "parallel"),
            vmem_limit_bytes=vmem_limit(2 * row_elems * hw_tile * itemsize),
        ),
        cost_estimate=cost,
    )(x1.reshape(B, C1, HW), x2.reshape(B, C2, HW))
    return out.reshape(B, Cout, H, W)


def model_forward_ref(x1, x2):
    """Pure-JAX reference mirroring the PyTorch semantics exactly."""
    v1 = jnp.concatenate((x1, x2), axis=1)
    v2 = v1[:, 0:9223372036854775807]
    v3 = v2[:, 0:x1.shape[2]]
    v4 = jnp.concatenate((v1, v3), axis=1)
    return v4


if __name__ == "__main__":
    key = jax.random.PRNGKey(0)
    k1, k2 = jax.random.split(key)

    # Small NCHW shapes consistent with the module's forward (needs a dim-2).
    x1 = jax.random.normal(k1, (2, 4, 16, 16), dtype=jnp.float32)
    x2 = jax.random.normal(k2, (2, 4, 16, 16), dtype=jnp.float32)

    out = model_forward(x1, x2)
    out = jax.block_until_ready(out)

    ref = model_forward_ref(x1, x2)
    assert out.shape == ref.shape, (out.shape, ref.shape)
    assert jnp.allclose(out, ref), "Pallas output does not match reference"

    print("KERNEL_OK")
</pallas_src>

<mosaic_0001>
module attributes {stable_mosaic.version = 11 : i64} {
  func.func @kernel(%arg0: i32, %arg1: memref<2x1024xf32, #tpu.memory_space<vmem>>, %arg2: memref<2x1024xf32, #tpu.memory_space<vmem>>, %arg3: memref<2x4096xf32, #tpu.memory_space<vmem>>) attributes {dimension_semantics = [#tpu.dimension_semantics<parallel>], iteration_bounds = array<i64: 1>, scalar_prefetch = 0 : i64, scratch_operands = 0 : i64, tpu.core_type = #tpu.core_type<tc>, window_params = [{transform_indices = @transform_0, window_bounds = array<i64: 2, 1024>}, {transform_indices = @transform_1, window_bounds = array<i64: 2, 1024>}, {transform_indices = @transform_2, window_bounds = array<i64: 2, 4096>}]} {
    %c0 = arith.constant 0 : index
    %c0_0 = arith.constant 0 : index
    %0 = vector.load %arg1[%c0, %c0_0] : memref<2x1024xf32, #tpu.memory_space<vmem>>, vector<2x1024xf32>
    %c0_1 = arith.constant 0 : index
    %c0_2 = arith.constant 0 : index
    %1 = vector.load %arg2[%c0_1, %c0_2] : memref<2x1024xf32, #tpu.memory_space<vmem>>, vector<2x1024xf32>
    %c0_3 = arith.constant 0 : index
    %c0_4 = arith.constant 0 : index
    %2 = vector.load %arg3[%c0_3, %c0_4] : memref<2x4096xf32, #tpu.memory_space<vmem>>, vector<2x1024xf32>
    tpu.vector_store %arg3[%c0_3, %c0_4], %0 {strides = array<i32>} : memref<2x4096xf32, #tpu.memory_space<vmem>>, vector<2x1024xf32>,
    %c0_5 = arith.constant 0 : index
    %c1024 = arith.constant 1024 : index
    %3 = vector.load %arg3[%c0_5, %c1024] : memref<2x4096xf32, #tpu.memory_space<vmem>>, vector<2x1024xf32>
    tpu.vector_store %arg3[%c0_5, %c1024], %1 {strides = array<i32>} : memref<2x4096xf32, #tpu.memory_space<vmem>>, vector<2x1024xf32>,
    %c0_6 = arith.constant 0 : index
    %c2048 = arith.constant 2048 : index
    %4 = vector.load %arg3[%c0_6, %c2048] : memref<2x4096xf32, #tpu.memory_space<vmem>>, vector<2x1024xf32>
    tpu.vector_store %arg3[%c0_6, %c2048], %0 {strides = array<i32>} : memref<2x4096xf32, #tpu.memory_space<vmem>>, vector<2x1024xf32>,
    %c0_7 = arith.constant 0 : index
    %c3072 = arith.constant 3072 : index
    %5 = vector.load %arg3[%c0_7, %c3072] : memref<2x4096xf32, #tpu.memory_space<vmem>>, vector<2x1024xf32>
    tpu.vector_store %arg3[%c0_7, %c3072], %1 {strides = array<i32>} : memref<2x4096xf32, #tpu.memory_space<vmem>>, vector<2x1024xf32>,
    return
  }
  func.func @transform_0(%arg0: i32) -> (i32, i32) {
    %c0_i32 = arith.constant 0 : i32
    %c0_i32_0 = arith.constant 0 : i32
    return %arg0, %c0_i32 : i32, i32
  }
  func.func @transform_1(%arg0: i32) -> (i32, i32) {
    %c0_i32 = arith.constant 0 : i32
    %c0_i32_0 = arith.constant 0 : i32
    return %arg0, %c0_i32 : i32, i32
  }
  func.func @transform_2(%arg0: i32) -> (i32, i32) {
    %c0_i32 = arith.constant 0 : i32
    %c0_i32_0 = arith.constant 0 : i32
    return %arg0, %c0_i32 : i32, i32
  }
}

</mosaic_0001>

<llo_original>
// kernel: tpu_custom_call.1
$region0: #{tpu_custom_call.1}
  #allocation0 [shape = 'u32[]', space=smem, size = 0x4, offset = 0x4, fixed_abs, tag = 'smem constant byte address 0x4 - core index']
  #allocation1 [shape = 'u32[144,128]{1,0:T(1,128)}', space=vmem, size = 0x12000, scoped, tag = 'internal scratch']
  %s0 = inlined_call_operand.hbm [shape: f32[2,1024], index: 0, kind: input, shape index: {}]
  %s1 = inlined_call_operand.hbm [shape: f32[2,1024], index: 1, kind: input, shape index: {}]
  %s2 = inlined_call_operand.hbm [shape: f32[2,4096], index: 2, kind: output, shape index: {}]
  %s3 = sld [smem:[#allocation0]]
  $region26: #{tpu_custom_call.1} parent=0
    _
  %s5 = ssub.s32 1, %s3
  %s6 = scalar_select 0, %s5, %s3
  $region1: #{tpu_custom_call.1} parent=0
    #allocation2 [shape = 'u8[8192]{0}', space=vmem, size = 0x2000, scoped, tag = 'input window, operand 0, single buffered']
    #allocation3 [shape = 's32[1]{0}', space=sflag, size = 0x4, scoped, tag = 'scoped memory for tpu_custom_call.1']
    #allocation4 [shape = 's32[1]{0}', space=sflag, size = 0x4, scoped, tag = 'scoped memory for tpu_custom_call.1']
    #allocation5 [shape = 'u8[8192]{0}', space=vmem, size = 0x2000, scoped, tag = 'input window, operand 1, single buffered']
    #allocation6 [shape = 's32[1]{0}', space=sflag, size = 0x4, scoped, tag = 'scoped memory for tpu_custom_call.1']
    #allocation7 [shape = 'u8[32768]{0}', space=vmem, size = 0x8000, scoped, tag = 'output window, operand 0, single buffered']
    %7 = vsyncpa [#allocation3], 0
    %8 = vsyncpa [#allocation6], 0
    %9 = vsyncpa [#allocation4], 0
    // Predicated region
    $region2: #{tpu_custom_call.1} parent=1 // pred_check
      _
    $region3: #{tpu_custom_call.1} parent=1 // pred_check_branch
      %11 = sbr.rel (0) target = $region5
    $region4: #{tpu_custom_call.1} parent=1 // pred_region
      %s13 = ssub.s32 256, 256
      %14 = vsyncadd [#allocation3], %s13
      %s16 = sshll.u32 [#allocation2], 4
      %s17 = int_to_ptr.vmem [resolvable:$true] %s16
      %19 = dma.hbm_to_vmem [thread:$0]  %s0, 256, %s17, [#allocation3]
    $region5: #{tpu_custom_call.1} parent=1 // pred_fallthru
      _
    // Predicated region
    $region6: #{tpu_custom_call.1} parent=1 // pred_check
      _
    $region7: #{tpu_custom_call.1} parent=1 // pred_check_branch
      %21 = sbr.rel (0) target = $region9
    $region8: #{tpu_custom_call.1} parent=1 // pred_region
      %s23 = ssub.s32 256, 256
      %24 = vsyncadd [#allocation6], %s23
      %s26 = sshll.u32 [#allocation5], 4
      %s27 = int_to_ptr.vmem [resolvable:$true] %s26
      %29 = dma.hbm_to_vmem [thread:$0]  %s1, 256, %s27, [#allocation6]
    $region9: #{tpu_custom_call.1} parent=1 // pred_fallthru
      _
    // Predicated region
    $region10: #{tpu_custom_call.1} parent=1 // pred_check
      _
    $region11: #{tpu_custom_call.1} parent=1 // pred_check_branch
      %31 = sbr.rel (0) target = $region13
    $region12: #{tpu_custom_call.1} parent=1 // pred_region
      %32 = dma.done [#allocation3], 256
    $region13: #{tpu_custom_call.1} parent=1 // pred_fallthru
      _
    // Predicated region
    $region14: #{tpu_custom_call.1} parent=1 // pred_check
      _
    $region15: #{tpu_custom_call.1} parent=1 // pred_check_branch
      %34 = sbr.rel (0) target = $region17
    $region16: #{tpu_custom_call.1} parent=1 // pred_region
      %35 = dma.done [#allocation6], 256
    $region17: #{tpu_custom_call.1} parent=1 // pred_fallthru
      _
    %v36 = vld [vmem:[#allocation2] sm:$0xff]
    %v37 = vld [vmem:[#allocation2 + $0x8] sm:$0xff]
    %v38 = vld [vmem:[#allocation5] sm:$0xff]
    %v39 = vld [vmem:[#allocation5 + $0x8] sm:$0xff]
    %40 = vst [vmem:[#allocation7] sm:$0xff] %v36
    %41 = vst [vmem:[#allocation7 + $0x8] sm:$0xff] %v37
    %42 = vst [vmem:[#allocation7 + $0x10] sm:$0xff] %v38
    %43 = vst [vmem:[#allocation7 + $0x18] sm:$0xff] %v39
    %44 = vst [vmem:[#allocation7 + $0x20] sm:$0xff] %v36
    %45 = vst [vmem:[#allocation7 + $0x28] sm:$0xff] %v37
    %46 = vst [vmem:[#allocation7 + $0x30] sm:$0xff] %v38
    %47 = vst [vmem:[#allocation7 + $0x38] sm:$0xff] %v39
    // Predicated region
    $region18: #{tpu_custom_call.1} parent=1 // pred_check
      _
    $region19: #{tpu_custom_call.1} parent=1 // pred_check_branch
      %49 = sbr.rel (0) target = $region21
    $region20: #{tpu_custom_call.1} parent=1 // pred_region
      %s51 = ssub.s32 1024, 1024
      %52 = vsyncadd [#allocation4], %s51
      %s54 = sshll.u32 [#allocation7], 4
      %s55 = int_to_ptr.vmem [resolvable:$true] %s54
      %57 = dma.vmem_to_hbm [thread:$0]  %s55, 1024, %s2, [#allocation4]
    $region21: #{tpu_custom_call.1} parent=1 // pred_fallthru
      _
    // Predicated region
    $region22: #{tpu_custom_call.1} parent=1 // pred_check
      _
    $region23: #{tpu_custom_call.1} parent=1 // pred_check_branch
      %59 = sbr.rel (0) target = $region25
    $region24: #{tpu_custom_call.1} parent=1 // pred_region
      %60 = dma.done [#allocation4], 1024
    $region25: #{tpu_custom_call.1} parent=1 // pred_fallthru
      _
    %61 = vsyncpa [#allocation3], 1
    %62 = vsyncpa [#allocation6], 1
    %63 = vsyncpa [#allocation4], 1

</llo_original>
